<compile_context>
chip_gen: v5e
topology: v5e:2x2
jax: 0.10.0
libtpu: 0.0.40
codegen_flags: <defaults>
</compile_context>

<pallas_src>
import math

import jax
import jax.numpy as jnp
from jax.experimental import pallas as pl
from jax.experimental.pallas import tpu as pltpu


# ----------------------------- Pallas kernel -------------------------------

def ffn_kernel(x_ref, w1x_ref, w1g_ref, b1x_ref, b1g_ref, w2_ref, b2_ref,
               o_ref, acc_ref):
    # x_ref  : (tm, dim)    current row tile (MXU dtype, e.g. bf16)
    # w1x_ref: (dim, th)    x1-half chunk of W1 (pre-transposed)
    # w1g_ref: (dim, th)    gate-half chunk of W1
    # b1x_ref: (1, th)      f32
    # b1g_ref: (1, th)      f32
    # w2_ref : (th, dim)    pre-transposed W2 chunk
    # b2_ref : (1, dim)     f32
    # o_ref  : (tm, dim)    output tile
    # acc_ref: (tm, dim)    f32 scratch accumulator across hidden tiles
    h_idx = pl.program_id(1)

    @pl.when(h_idx == 0)
    def _():
        acc_ref[...] = jnp.zeros_like(acc_ref)

    xm = x_ref[...]  # already in MXU dtype

    # First linear, both halves (full-tile-M MXU matmuls), f32 accumulation.
    x1 = jnp.dot(xm, w1x_ref[...], preferred_element_type=jnp.float32) + b1x_ref[...]
    gate = jnp.dot(xm, w1g_ref[...], preferred_element_type=jnp.float32) + b1g_ref[...]

    # GEGLU gating in f32 on VPU/EUP (tanh-form GELU).
    hact = x1 * jax.nn.gelu(gate, approximate=True)

    # Second linear: partial contribution of this hidden chunk, accumulated in f32.
    acc_ref[...] += jnp.dot(hact.astype(w2_ref.dtype), w2_ref[...],
                            preferred_element_type=jnp.float32)

    @pl.when(h_idx == pl.num_programs(1) - 1)
    def _():
        o_ref[...] = (acc_ref[...] + b2_ref[...]).astype(o_ref.dtype)


# ----------------------------- Python wrappers -------------------------------

def pack_feed_forward_params(params, mxu_dtype=jnp.bfloat16):
    """One-time packing of PyTorch nn.Linear weights into kernel layout.

    params (PyTorch layout): w1 (2*hidden, dim), b1 (2*hidden,),
                             w2 (dim, hidden),   b2 (dim,)
    """
    w1, b1 = params["w1"], params["b1"]
    w2, b2 = params["w2"], params["b2"]
    dim, hidden = w2.shape
    assert w1.shape == (2 * hidden, dim) and b1.shape == (2 * hidden,)
    assert b2.shape == (dim,)
    return {
        "w1x": jnp.transpose(w1[:hidden, :]).astype(mxu_dtype),   # (dim, hidden)
        "w1g": jnp.transpose(w1[hidden:, :]).astype(mxu_dtype),   # (dim, hidden)
        "b1x": b1[:hidden].reshape(1, hidden).astype(jnp.float32),
        "b1g": b1[hidden:].reshape(1, hidden).astype(jnp.float32),
        "w2t": jnp.transpose(w2).astype(mxu_dtype),                # (hidden, dim)
        "b2": b2.reshape(1, dim).astype(jnp.float32),
    }


def feed_forward_forward(x, packed, *, block_rows=256, block_hidden=1024,
                         out_dtype=None):
    """Fused FeedForward forward (eval mode). `packed` from pack_feed_forward_params."""
    orig_shape = x.shape
    dim = orig_shape[-1]
    M = math.prod(orig_shape[:-1])
    hidden = packed["w2t"].shape[0]
    assert packed["w1x"].shape == (dim, hidden)

    mxu_dtype = packed["w1x"].dtype
    out_dtype = x.dtype if out_dtype is None else out_dtype

    # Row tile: fixed size; ragged last tile handled by Pallas clipping (cdiv grid).
    assert block_rows % 8 == 0
    tm = M if M <= block_rows else block_rows

    # Hidden tile: must evenly divide hidden (it is the reduction axis -- padded
    # weight reads would corrupt the accumulator) and be a multiple of 128 lanes.
    th = hidden
    if hidden > block_hidden:
        start = block_hidden - (block_hidden % 128)
        for cand in range(start, 0, -128):
            if hidden % cand == 0:
                th = cand
                break

    grid = (pl.cdiv(M, tm), hidden // th)

    x2 = x.reshape(M, dim).astype(mxu_dtype)

    out2 = pl.pallas_call(
        ffn_kernel,
        out_shape=jax.ShapeDtypeStruct((M, dim), out_dtype),
        grid_spec=pltpu.PrefetchScalarGridSpec(
            num_scalar_prefetch=0,
            grid=grid,
            in_specs=[
                pl.BlockSpec((tm, dim), lambda i, h: (i, 0)),    # x row tile
                pl.BlockSpec((dim, th), lambda i, h: (0, h)),    # W1 x1-half chunk
                pl.BlockSpec((dim, th), lambda i, h: (0, h)),    # W1 gate-half chunk
                pl.BlockSpec((1, th), lambda i, h: (0, h)),      # b1 x1-half chunk
                pl.BlockSpec((1, th), lambda i, h: (0, h)),      # b1 gate-half chunk
                pl.BlockSpec((th, dim), lambda i, h: (h, 0)),    # W2 chunk
                pl.BlockSpec((1, dim), lambda i, h: (0, 0)),     # b2
            ],
            out_specs=pl.BlockSpec((tm, dim), lambda i, h: (i, 0)),
            scratch_shapes=[pltpu.VMEM((tm, dim), jnp.float32)],
        ),
        compiler_params=pltpu.CompilerParams(
            dimension_semantics=("parallel", "arbitrary"),
            vmem_limit_bytes=64 * 1024 * 1024,
        ),
    )(x2, packed["w1x"], packed["w1g"], packed["b1x"], packed["b1g"],
      packed["w2t"], packed["b2"])

    return out2.reshape(orig_shape)


# ------------------------------ pure-JAX reference ---------------------------

def feed_forward_reference(x, params):
    y = x @ params["w1"].T + params["b1"]
    hidden = params["w2"].shape[1]
    x1, gate = y[..., :hidden], y[..., hidden:]
    h = x1 * jax.nn.gelu(gate, approximate=True)
    return h @ params["w2"].T + params["b2"]


# ----------------------------------- main ------------------------------------

if __name__ == "__main__":
    # FeedForward(dim=128, mult=4): hidden = 512.  dim=128 keeps output stores
    # lane-dense.  N=9 -> M=18 rows, which with block_rows=8 exercises the ragged
    # (cdiv) row-tile path; block_hidden=256 exercises the hidden-tile accumulation.
    B, N, dim, mult = 2, 9, 128, 4
    hidden = dim * mult

    key = jax.random.PRNGKey(0)
    kx, k1, kb1, k2, kb2 = jax.random.split(key, 5)

    x = jax.random.normal(kx, (B, N, dim), dtype=jnp.float32)
    params = {
        "w1": 0.1 * jax.random.normal(k1, (2 * hidden, dim), jnp.float32),
        "b1": 0.1 * jax.random.normal(kb1, (2 * hidden,), jnp.float32),
        "w2": 0.1 * jax.random.normal(k2, (dim, hidden), jnp.float32),
        "b2": 0.1 * jax.random.normal(kb2, (dim,), jnp.float32),
    }

    ref = feed_forward_reference(x, params)

    # f32-MXU path: tight check.
    packed_f32 = pack_feed_forward_params(params, mxu_dtype=jnp.float32)
    out_f32 = jax.block_until_ready(
        feed_forward_forward(x, packed_f32, block_rows=8, block_hidden=256))
    assert out_f32.shape == (B, N, dim)
    assert jnp.allclose(out_f32, ref, rtol=1e-3, atol=1e-3), "f32 path mismatch"

    # bf16-MXU / f32-accumulate path (default): relaxed check.
    packed_bf16 = pack_feed_forward_params(params, mxu_dtype=jnp.bfloat16)
    out_bf16 = jax.block_until_ready(
        feed_forward_forward(x, packed_bf16, block_rows=8, block_hidden=256))
    assert out_bf16.shape == (B, N, dim)
    assert jnp.allclose(out_bf16, ref, rtol=5e-2, atol=5e-2), "bf16 path mismatch"

    print("KERNEL_OK")
</pallas_src>

<mosaic_0001>
module attributes {stable_mosaic.version = 11 : i64} {
  func.func @ffn_kernel(%arg0: i32, %arg1: i32, %arg2: memref<8x128xf32, #tpu.memory_space<vmem>>, %arg3: memref<128x256xf32, #tpu.memory_space<vmem>>, %arg4: memref<128x256xf32, #tpu.memory_space<vmem>>, %arg5: memref<1x256xf32, #tpu.memory_space<vmem>>, %arg6: memref<1x256xf32, #tpu.memory_space<vmem>>, %arg7: memref<256x128xf32, #tpu.memory_space<vmem>>, %arg8: memref<1x128xf32, #tpu.memory_space<vmem>>, %arg9: memref<8x128xf32, #tpu.memory_space<vmem>>, %arg10: memref<8x128xf32, #tpu.memory_space<vmem>>) attributes {dimension_semantics = [#tpu.dimension_semantics<parallel>, #tpu.dimension_semantics<arbitrary>], iteration_bounds = array<i64: 3, 2>, scalar_prefetch = 0 : i64, scratch_operands = 1 : i64, tpu.core_type = #tpu.core_type<tc>, window_params = [{transform_indices = @transform_0, window_bounds = array<i64: 8, 128>}, {transform_indices = @transform_1, window_bounds = array<i64: 128, 256>}, {transform_indices = @transform_2, window_bounds = array<i64: 128, 256>}, {transform_indices = @transform_3, window_bounds = array<i64: 1, 256>}, {transform_indices = @transform_4, window_bounds = array<i64: 1, 256>}, {transform_indices = @transform_5, window_bounds = array<i64: 256, 128>}, {pipeline_mode = #tpu.pipeline_mode<synchronous>, transform_indices = @transform_6, window_bounds = array<i64: 1, 128>}, {transform_indices = @transform_7, window_bounds = array<i64: 8, 128>}]} {
    %c0_i32 = arith.constant 0 : i32
    %0 = arith.cmpi eq, %arg1, %c0_i32 : i32
    %1 = arith.extui %0 : i1 to i32
    %c0_i32_0 = arith.constant 0 : i32
    %2 = arith.cmpi ne, %1, %c0_i32_0 : i32
    scf.if %2 {
      %cst_23 = arith.constant 0.000000e+00 : f32
      %36 = vector.broadcast %cst_23 : f32 to vector<8x128xf32>
      %c0_24 = arith.constant 0 : index
      %c0_25 = arith.constant 0 : index
      %37 = vector.load %arg10[%c0_24, %c0_25] : memref<8x128xf32, #tpu.memory_space<vmem>>, vector<8x128xf32>
      tpu.vector_store %arg10[%c0_24, %c0_25], %36 {strides = array<i32>} : memref<8x128xf32, #tpu.memory_space<vmem>>, vector<8x128xf32>,
    } else {
    }
    %c0 = arith.constant 0 : index
    %c0_1 = arith.constant 0 : index
    %3 = vector.load %arg2[%c0, %c0_1] : memref<8x128xf32, #tpu.memory_space<vmem>>, vector<8x128xf32>
    %c0_2 = arith.constant 0 : index
    %c0_3 = arith.constant 0 : index
    %4 = vector.load %arg3[%c0_2, %c0_3] : memref<128x256xf32, #tpu.memory_space<vmem>>, vector<128x256xf32>
    %cst = arith.constant dense<0.000000e+00> : vector<8x256xf32>
    %5 = tpu.matmul %3, %4, %cst {dimension_numbers = #tpu.dot_dimension_numbers<[1], [0], [0], [1], [0, 0, 1, 1], [], []>} : vector<8x128xf32>, vector<128x256xf32>, vector<8x256xf32> -> vector<8x256xf32>
    %c0_4 = arith.constant 0 : index
    %c0_5 = arith.constant 0 : index
    %6 = vector.load %arg5[%c0_4, %c0_5] : memref<1x256xf32, #tpu.memory_space<vmem>>, vector<1x256xf32>
    %7 = vector.broadcast %6 : vector<1x256xf32> to vector<8x256xf32>
    %8 = arith.addf %5, %7 : vector<8x256xf32>
    %c0_6 = arith.constant 0 : index
    %c0_7 = arith.constant 0 : index
    %9 = vector.load %arg4[%c0_6, %c0_7] : memref<128x256xf32, #tpu.memory_space<vmem>>, vector<128x256xf32>
    %cst_8 = arith.constant dense<0.000000e+00> : vector<8x256xf32>
    %10 = tpu.matmul %3, %9, %cst_8 {dimension_numbers = #tpu.dot_dimension_numbers<[1], [0], [0], [1], [0, 0, 1, 1], [], []>} : vector<8x128xf32>, vector<128x256xf32>, vector<8x256xf32> -> vector<8x256xf32>
    %c0_9 = arith.constant 0 : index
    %c0_10 = arith.constant 0 : index
    %11 = vector.load %arg6[%c0_9, %c0_10] : memref<1x256xf32, #tpu.memory_space<vmem>>, vector<1x256xf32>
    %12 = vector.broadcast %11 : vector<1x256xf32> to vector<8x256xf32>
    %13 = arith.addf %10, %12 : vector<8x256xf32>
    %14 = arith.mulf %13, %13 : vector<8x256xf32>
    %15 = arith.mulf %13, %14 : vector<8x256xf32>
    %cst_11 = arith.constant 4.471500e-02 : f32
    %16 = vector.broadcast %cst_11 : f32 to vector<8x256xf32>
    %17 = arith.mulf %16, %15 : vector<8x256xf32>
    %18 = arith.addf %13, %17 : vector<8x256xf32>
    %cst_12 = arith.constant 0.797884583 : f32
    %19 = vector.broadcast %cst_12 : f32 to vector<8x256xf32>
    %20 = arith.mulf %19, %18 : vector<8x256xf32>
    %21 = math.tanh %20 : vector<8x256xf32>
    %cst_13 = arith.constant 1.000000e+00 : f32
    %22 = vector.broadcast %cst_13 : f32 to vector<8x256xf32>
    %23 = arith.addf %22, %21 : vector<8x256xf32>
    %cst_14 = arith.constant 5.000000e-01 : f32
    %24 = vector.broadcast %cst_14 : f32 to vector<8x256xf32>
    %25 = arith.mulf %24, %23 : vector<8x256xf32>
    %26 = arith.mulf %13, %25 : vector<8x256xf32>
    %27 = arith.mulf %8, %26 : vector<8x256xf32>
    %c0_15 = arith.constant 0 : index
    %c0_16 = arith.constant 0 : index
    %28 = vector.load %arg10[%c0_15, %c0_16] : memref<8x128xf32, #tpu.memory_space<vmem>>, vector<8x128xf32>
    %c0_17 = arith.constant 0 : index
    %c0_18 = arith.constant 0 : index
    %29 = vector.load %arg7[%c0_17, %c0_18] : memref<256x128xf32, #tpu.memory_space<vmem>>, vector<256x128xf32>
    %cst_19 = arith.constant dense<0.000000e+00> : vector<8x128xf32>
    %30 = tpu.matmul %27, %29, %cst_19 {dimension_numbers = #tpu.dot_dimension_numbers<[1], [0], [0], [1], [0, 0, 1, 1], [], []>} : vector<8x256xf32>, vector<256x128xf32>, vector<8x128xf32> -> vector<8x128xf32>
    %31 = arith.addf %28, %30 : vector<8x128xf32>
    %c0_20 = arith.constant 0 : index
    %c0_21 = arith.constant 0 : index
    %32 = vector.load %arg10[%c0_20, %c0_21] : memref<8x128xf32, #tpu.memory_space<vmem>>, vector<8x128xf32>
    tpu.vector_store %arg10[%c0_20, %c0_21], %31 {strides = array<i32>} : memref<8x128xf32, #tpu.memory_space<vmem>>, vector<8x128xf32>,
    %c1_i32 = arith.constant 1 : i32
    %33 = arith.cmpi eq, %arg1, %c1_i32 : i32
    %34 = arith.extui %33 : i1 to i32
    %c0_i32_22 = arith.constant 0 : i32
    %35 = arith.cmpi ne, %34, %c0_i32_22 : i32
    scf.if %35 {
      %c0_23 = arith.constant 0 : index
      %c0_24 = arith.constant 0 : index
      %36 = vector.load %arg10[%c0_23, %c0_24] : memref<8x128xf32, #tpu.memory_space<vmem>>, vector<8x128xf32>
      %c0_25 = arith.constant 0 : index
      %c0_26 = arith.constant 0 : index
      %37 = vector.load %arg8[%c0_25, %c0_26] : memref<1x128xf32, #tpu.memory_space<vmem>>, vector<1x128xf32>
      %38 = vector.broadcast %37 : vector<1x128xf32> to vector<8x128xf32>
      %39 = arith.addf %36, %38 : vector<8x128xf32>
      %c0_27 = arith.constant 0 : index
      %c0_28 = arith.constant 0 : index
      %40 = vector.load %arg9[%c0_27, %c0_28] : memref<8x128xf32, #tpu.memory_space<vmem>>, vector<8x128xf32>
      tpu.vector_store %arg9[%c0_27, %c0_28], %39 {strides = array<i32>} : memref<8x128xf32, #tpu.memory_space<vmem>>, vector<8x128xf32>,
    } else {
    }
    return
  }
  func.func @transform_0(%arg0: i32, %arg1: i32) -> (i32, i32) {
    %c0_i32 = arith.constant 0 : i32
    %c0_i32_0 = arith.constant 0 : i32
    return %arg0, %c0_i32 : i32, i32
  }
  func.func @transform_1(%arg0: i32, %arg1: i32) -> (i32, i32) {
    %c0_i32 = arith.constant 0 : i32
    %c0_i32_0 = arith.constant 0 : i32
    return %c0_i32, %arg1 : i32, i32
  }
  func.func @transform_2(%arg0: i32, %arg1: i32) -> (i32, i32) {
    %c0_i32 = arith.constant 0 : i32
    %c0_i32_0 = arith.constant 0 : i32
    return %c0_i32, %arg1 : i32, i32
  }
  func.func @transform_3(%arg0: i32, %arg1: i32) -> (i32, i32) {
    %c0_i32 = arith.constant 0 : i32
    %c0_i32_0 = arith.constant 0 : i32
    return %c0_i32, %arg1 : i32, i32
  }
  func.func @transform_4(%arg0: i32, %arg1: i32) -> (i32, i32) {
    %c0_i32 = arith.constant 0 : i32
    %c0_i32_0 = arith.constant 0 : i32
    return %c0_i32, %arg1 : i32, i32
  }
  func.func @transform_5(%arg0: i32, %arg1: i32) -> (i32, i32) {
    %c0_i32 = arith.constant 0 : i32
    %c0_i32_0 = arith.constant 0 : i32
    return %arg1, %c0_i32 : i32, i32
  }
  func.func @transform_6(%arg0: i32, %arg1: i32) -> (i32, i32) {
    %c0_i32 = arith.constant 0 : i32
    %c0_i32_0 = arith.constant 0 : i32
    %c0_i32_1 = arith.constant 0 : i32
    return %c0_i32, %c0_i32_0 : i32, i32
  }
  func.func @transform_7(%arg0: i32, %arg1: i32) -> (i32, i32) {
    %c0_i32 = arith.constant 0 : i32
    %c0_i32_0 = arith.constant 0 : i32
    return %arg0, %c0_i32 : i32, i32
  }
}

</mosaic_0001>

<llo_original>
// kernel: tpu_custom_call.1
$region0: #{tpu_custom_call.1}
  #allocation0 [shape = 'u32[]', space=smem, size = 0x4, offset = 0x4, fixed_abs, tag = 'smem constant byte address 0x4 - core index']
  #allocation1 [shape = 'u32[72,128]{1,0:T(1,128)}', space=vmem, size = 0x9000, scoped, tag = 'internal scratch']
  #allocation2 [shape = 'f32[8,128]{1,0:T(8,128)}', space=vmem, size = 0x1000, scoped, tag = 'scratch operand']
  %s0 = inlined_call_operand.hbm [shape: f32[18,128], index: 0, kind: input, shape index: {}]
  %s1 = inlined_call_operand.hbm [shape: f32[128,512], index: 1, kind: input, shape index: {}]
  %s2 = inlined_call_operand.hbm [shape: f32[128,512], index: 2, kind: input, shape index: {}]
  %s3 = inlined_call_operand.hbm [shape: f32[1,512], index: 3, kind: input, shape index: {}]
  %s4 = inlined_call_operand.hbm [shape: f32[1,512], index: 4, kind: input, shape index: {}]
  %s5 = inlined_call_operand.hbm [shape: f32[512,128], index: 5, kind: input, shape index: {}]
  %s6 = inlined_call_operand.vmem [shape: f32[1,128], index: 6, kind: input, shape index: {}]
  %s7 = inlined_call_operand.hbm [shape: f32[18,128], index: 7, kind: output, shape index: {}]
  %s8 = sld [smem:[#allocation0]]
  $region93: #{tpu_custom_call.1} parent=0
    _
  %s10 = ssub.s32 1, %s8
  %s11 = scalar_select 0, %s10, %s8
  $region1: #{tpu_custom_call.1} parent=0
    #allocation3 [shape = 'u8[8192]{0}', space=vmem, size = 0x2000, scoped, tag = 'input window, operand 0']
    #allocation4 [shape = 's32[2]{0}', space=sflag, size = 0x8, scoped, tag = 'scoped memory for tpu_custom_call.1']
    #allocation5 [shape = 's32[2]{0}', space=sflag, size = 0x8, scoped, tag = 'scoped memory for tpu_custom_call.1']
    #allocation6 [shape = 'u8[262144]{0}', space=vmem, size = 0x40000, scoped, tag = 'input window, operand 1']
    #allocation7 [shape = 's32[2]{0}', space=sflag, size = 0x8, scoped, tag = 'scoped memory for tpu_custom_call.1']
    #allocation8 [shape = 'u8[262144]{0}', space=vmem, size = 0x40000, scoped, tag = 'input window, operand 2']
    #allocation9 [shape = 'u8[2048]{0}', space=vmem, size = 0x800, scoped, tag = 'input window, operand 3']
    #allocation10 [shape = 's32[2]{0}', space=sflag, size = 0x8, scoped, tag = 'scoped memory for tpu_custom_call.1']
    #allocation11 [shape = 'u8[2048]{0}', space=vmem, size = 0x800, scoped, tag = 'input window, operand 4']
    #allocation12 [shape = 'u8[262144]{0}', space=vmem, size = 0x40000, scoped, tag = 'input window, operand 5']
    #allocation13 [shape = 's32[2]{0}', space=sflag, size = 0x8, scoped, tag = 'scoped memory for tpu_custom_call.1']
    #allocation14 [shape = 'u8[8192]{0}', space=vmem, size = 0x2000, scoped, tag = 'output window, operand 0']
    %12 = vsyncpa [#allocation4], 0
    %s13 = scalar_lea.sflag [#allocation4], 1
    %14 = vsyncpa %s13, 0
    %15 = vsyncpa [#allocation7], 0
    %s16 = scalar_lea.sflag [#allocation7], 1
    %17 = vsyncpa %s16, 0
    %18 = vsyncpa [#allocation10], 0
    %s19 = scalar_lea.sflag [#allocation10], 1
    %20 = vsyncpa %s19, 0
    %21 = vsyncpa [#allocation13], 0
    %s22 = scalar_lea.sflag [#allocation13], 1
    %23 = vsyncpa %s22, 0
    %24 = vsyncpa [#allocation5], 0
    %s25 = scalar_lea.sflag [#allocation5], 1
    %26 = vsyncpa %s25, 0
    loop: start=0, step=1, limit=8
    $region2: #{tpu_custom_call.1} parent=1 // loop_pre_header
      _
    $region3: #{tpu_custom_call.1} parent=1 // loop_header
      %s28 = sphi 0, %s32
      %p29 = scmp.ge.s32.totalorder %s28, 8
      %s35 = sphi 0, %s47
      %s36 = sphi 0, %s43
      %s37 = sphi 0, %s35
      %s38 = sphi 0, %s36
      %s39 = sphi 0, %s37
      %s40 = sphi 0, %s38
      %s50 = sphi 0, %s52
      %s53 = sphi 0, %s50
      %s54 = sphi 0, %s53
      %s70 = sphi 0, %s54
      %s76 = sphi 0, %s78
      %s79 = sphi 0, %s76
      %s80 = sphi 0, %s79
      %s96 = sphi 0, %s80
      %s102 = sphi 0, %s104
      %s105 = sphi 0, %s102
      %s106 = sphi 0, %s105
      %s122 = sphi 0, %s106
      %s128 = sphi 0, %s130
      %s131 = sphi 0, %s128
      %s132 = sphi 0, %s131
      %s148 = sphi 0, %s132
      %s154 = sphi 0, %s156
      %s157 = sphi 0, %s154
      %s158 = sphi 0, %s157
      %s174 = sphi 0, %s158
      %s180 = sphi 0, %s182
      %s183 = sphi 0, %s180
      %s184 = sphi 0, %s183
      %s200 = sphi 0, %s184
      %s204 = sphi 0, %s204
      %s206 = sphi 0, %s204
      %s207 = sphi 0, %s206
      %s221 = sphi 0, %s207
      %s227 = sphi 0, %s229
      %s230 = sphi 0, %s227
      %s231 = sphi 0, %s230
      %s247 = sphi 0, %s231
    $region4: #{tpu_custom_call.1} parent=1 // loop_header_branch
      %31 = sbr.rel (%p29) target = $region8
    $region5: #{tpu_custom_call.1} parent=1 // loop_body
      %s33 = ssub.s32 %s28, 1
      %s34 = ssub.s32 %s28, 2
      %s41 = sadd.s32 1, %s36
      %p42 = scmp.ge.s32.totalorder %s41, 2
      %s43 = scalar_select %p42, 0, %s41
      %s44 = sadd.s32 1, %s35
      %s45 = scalar_select %p42, %s44, %s35
      %p46 = scmp.ge.s32.totalorder %s45, 3
      %s47 = scalar_select %p46, 0, %s45
      %s48 = ssub.s32 %s35, %s47
      %p49 = scmp.eq.s32.totalorder %s48, 0
      %s51 = sadd.s32 %s50, 1
      %s52 = scalar_select %p49, %s50, %s51
      %p55 = pneg %p49
      %p56 = scmp.eq.s32.totalorder %s28, 5
      %p57 = por %p55, %p56
      %p58 = scmp.ne.s32.totalorder %s50, %s53
      %p59 = scmp.eq.s32.totalorder %s28, 0
      %p60 = por %p58, %p59
      %p61 = scmp.ne.s32.totalorder %s50, %s53
      %p62 = scmp.eq.s32.totalorder %s33, 5
      %p63 = por %p61, %p62
      %p64 = scmp.ne.s32.totalorder %s53, %s54
      %p65 = scmp.eq.s32.totalorder %s33, 0
      %p66 = por %p64, %p65
      %p67 = scmp.ne.s32.totalorder %s53, %s54
      %p68 = scmp.eq.s32.totalorder %s34, 5
      %p69 = por %p67, %p68
      %p71 = scmp.ne.s32.totalorder %s54, %s70
      %p72 = scmp.eq.s32.totalorder %s34, 0
      %p73 = por %p71, %p72
      %s74 = ssub.s32 %s36, %s43
      %p75 = scmp.eq.s32.totalorder %s74, 0
      %s77 = sadd.s32 %s76, 1
      %s78 = scalar_select %p75, %s76, %s77
      %p81 = pneg %p75
      %p82 = scmp.eq.s32.totalorder %s28, 5
      %p83 = por %p81, %p82
      %p84 = scmp.ne.s32.totalorder %s76, %s79
      %p85 = scmp.eq.s32.totalorder %s28, 0
      %p86 = por %p84, %p85
      %p87 = scmp.ne.s32.totalorder %s76, %s79
      %p88 = scmp.eq.s32.totalorder %s33, 5
      %p89 = por %p87, %p88
      %p90 = scmp.ne.s32.totalorder %s79, %s80
      %p91 = scmp.eq.s32.totalorder %s33, 0
      %p92 = por %p90, %p91
      %p93 = scmp.ne.s32.totalorder %s79, %s80
      %p94 = scmp.eq.s32.totalorder %s34, 5
      %p95 = por %p93, %p94
      %p97 = scmp.ne.s32.totalorder %s80, %s96
      %p98 = scmp.eq.s32.totalorder %s34, 0
      %p99 = por %p97, %p98
      %s100 = ssub.s32 %s36, %s43
      %p101 = scmp.eq.s32.totalorder %s100, 0
      %s103 = sadd.s32 %s102, 1
      %s104 = scalar_select %p101, %s102, %s103
      %p107 = pneg %p101
      %p108 = scmp.eq.s32.totalorder %s28, 5
      %p109 = por %p107, %p108
      %p110 = scmp.ne.s32.totalorder %s102, %s105
      %p111 = scmp.eq.s32.totalorder %s28, 0
      %p112 = por %p110, %p111
      %p113 = scmp.ne.s32.totalorder %s102, %s105
      %p114 = scmp.eq.s32.totalorder %s33, 5
      %p115 = por %p113, %p114
      %p116 = scmp.ne.s32.totalorder %s105, %s106
      %p117 = scmp.eq.s32.totalorder %s33, 0
      %p118 = por %p116, %p117
      %p119 = scmp.ne.s32.totalorder %s105, %s106
      %p120 = scmp.eq.s32.totalorder %s34, 5
      %p121 = por %p119, %p120
      %p123 = scmp.ne.s32.totalorder %s106, %s122
      %p124 = scmp.eq.s32.totalorder %s34, 0
      %p125 = por %p123, %p124
      %s126 = ssub.s32 %s36, %s43
      %p127 = scmp.eq.s32.totalorder %s126, 0
      %s129 = sadd.s32 %s128, 1
      %s130 = scalar_select %p127, %s128, %s129
      %p133 = pneg %p127
      %p134 = scmp.eq.s32.totalorder %s28, 5
      %p135 = por %p133, %p134
      %p136 = scmp.ne.s32.totalorder %s128, %s131
      %p137 = scmp.eq.s32.totalorder %s28, 0
      %p138 = por %p136, %p137
      %p139 = scmp.ne.s32.totalorder %s128, %s131
      %p140 = scmp.eq.s32.totalorder %s33, 5
      %p141 = por %p139, %p140
      %p142 = scmp.ne.s32.totalorder %s131, %s132
      %p143 = scmp.eq.s32.totalorder %s33, 0
      %p144 = por %p142, %p143
      %p145 = scmp.ne.s32.totalorder %s131, %s132
      %p146 = scmp.eq.s32.totalorder %s34, 5
      %p147 = por %p145, %p146
      %p149 = scmp.ne.s32.totalorder %s132, %s148
      %p150 = scmp.eq.s32.totalorder %s34, 0
      %p151 = por %p149, %p150
      %s152 = ssub.s32 %s36, %s43
      %p153 = scmp.eq.s32.totalorder %s152, 0
      %s155 = sadd.s32 %s154, 1
      %s156 = scalar_select %p153, %s154, %s155
      %p159 = pneg %p153
      %p160 = scmp.eq.s32.totalorder %s28, 5
      %p161 = por %p159, %p160
      %p162 = scmp.ne.s32.totalorder %s154, %s157
      %p163 = scmp.eq.s32.totalorder %s28, 0
      %p164 = por %p162, %p163
      %p165 = scmp.ne.s32.totalorder %s154, %s157
      %p166 = scmp.eq.s32.totalorder %s33, 5
      %p167 = por %p165, %p166
      %p168 = scmp.ne.s32.totalorder %s157, %s158
      %p169 = scmp.eq.s32.totalorder %s33, 0
      %p170 = por %p168, %p169
      %p171 = scmp.ne.s32.totalorder %s157, %s158
      %p172 = scmp.eq.s32.totalorder %s34, 5
      %p173 = por %p171, %p172
      %p175 = scmp.ne.s32.totalorder %s158, %s174
      %p176 = scmp.eq.s32.totalorder %s34, 0
      %p177 = por %p175, %p176
      %s178 = ssub.s32 %s36, %s43
      %p179 = scmp.eq.s32.totalorder %s178, 0
      %s181 = sadd.s32 %s180, 1
      %s182 = scalar_select %p179, %s180, %s181
      %p185 = pneg %p179
      %p186 = scmp.eq.s32.totalorder %s28, 5
      %p187 = por %p185, %p186
      %p188 = scmp.ne.s32.totalorder %s180, %s183
      %p189 = scmp.eq.s32.totalorder %s28, 0
      %p190 = por %p188, %p189
      %p191 = scmp.ne.s32.totalorder %s180, %s183
      %p192 = scmp.eq.s32.totalorder %s33, 5
      %p193 = por %p191, %p192
      %p194 = scmp.ne.s32.totalorder %s183, %s184
      %p195 = scmp.eq.s32.totalorder %s33, 0
      %p196 = por %p194, %p195
      %p197 = scmp.ne.s32.totalorder %s183, %s184
      %p198 = scmp.eq.s32.totalorder %s34, 5
      %p199 = por %p197, %p198
      %p201 = scmp.ne.s32.totalorder %s184, %s200
      %p202 = scmp.eq.s32.totalorder %s34, 0
      %p203 = por %p201, %p202
      %s205 = sadd.s32 %s204, 1
      %p208 = scmp.eq.s32.totalorder %s28, 5
      %p209 = scmp.ne.s32.totalorder %s204, %s206
      %p210 = scmp.eq.s32.totalorder %s28, 0
      %p211 = por %p209, %p210
      %p212 = scmp.ne.s32.totalorder %s204, %s206
      %p213 = scmp.eq.s32.totalorder %s33, 5
      %p214 = por %p212, %p213
      %p215 = scmp.ne.s32.totalorder %s206, %s207
      %p216 = scmp.eq.s32.totalorder %s33, 0
      %p217 = por %p215, %p216
      %p218 = scmp.ne.s32.totalorder %s206, %s207
      %p219 = scmp.eq.s32.totalorder %s34, 5
      %p220 = por %p218, %p219
      %p222 = scmp.ne.s32.totalorder %s207, %s221
      %p223 = scmp.eq.s32.totalorder %s34, 0
      %p224 = por %p222, %p223
      %s225 = ssub.s32 %s35, %s47
      %p226 = scmp.eq.s32.totalorder %s225, 0
      %s228 = sadd.s32 %s227, 1
      %s229 = scalar_select %p226, %s227, %s228
      %p232 = pneg %p226
      %p233 = scmp.eq.s32.totalorder %s28, 5
      %p234 = por %p232, %p233
      %p235 = scmp.ne.s32.totalorder %s227, %s230
      %p236 = scmp.eq.s32.totalorder %s28, 0
      %p237 = por %p235, %p236
      %p238 = scmp.ne.s32.totalorder %s227, %s230
      %p239 = scmp.eq.s32.totalorder %s33, 5
      %p240 = por %p238, %p239
      %p241 = scmp.ne.s32.totalorder %s230, %s231
      %p242 = scmp.eq.s32.totalorder %s33, 0
      %p243 = por %p241, %p242
      %p244 = scmp.ne.s32.totalorder %s230, %s231
      %p245 = scmp.eq.s32.totalorder %s34, 5
      %p246 = por %p244, %p245
      %p248 = scmp.ne.s32.totalorder %s231, %s247
      %p249 = scmp.eq.s32.totalorder %s34, 0
      %p250 = por %p248, %p249
      %p251 = scmp.le.s32.totalorder 1, %s28
      %p252 = scmp.lt.s32.totalorder %s28, 7
      %p253 = pnand %p251, %p252
      %p254 = pneg %p253
      // Predicated region
      $region9: #{tpu_custom_call.1} parent=5 // pred_check
        _
      $region10: #{tpu_custom_call.1} parent=5 // pred_check_branch
        %256 = sbr.rel (%p253) target = $region12
      $region11: #{tpu_custom_call.1} parent=5 // pred_region
        %s257 = ssub.s32 %s28, 1
        // Predicated region
        $region13: #{tpu_custom_call.1} parent=11 // pred_check
          %p258 = pneg %p217
        $region14: #{tpu_custom_call.1} parent=11 // pred_check_branch
          %260 = sbr.rel (%p258) target = $region16
        $region15: #{tpu_custom_call.1} parent=11 // pred_region
          _
        $region16: #{tpu_custom_call.1} parent=11 // pred_fallthru
          _
      $region12: #{tpu_custom_call.1} parent=5 // pred_fallthru
        _
      %p261 = scmp.lt.s32.totalorder %s28, 6
      // Predicated region
      $region17: #{tpu_custom_call.1} parent=5 // pred_check
        %p262 = pneg %p261
      $region18: #{tpu_custom_call.1} parent=5 // pred_check_branch
        %264 = sbr.rel (%p262) target = $region20
      $region19: #{tpu_custom_call.1} parent=5 // pred_region
        // Predicated region
        $region21: #{tpu_custom_call.1} parent=19 // pred_check
          %p265 = pneg %p60
        $region22: #{tpu_custom_call.1} parent=19 // pred_check_branch
          %267 = sbr.rel (%p265) target = $region24
        $region23: #{tpu_custom_call.1} parent=19 // pred_region
          %s268 = sand.u32 %s50, 1
          %s269 = scalar_lea.sflag [#allocation4], %s268
          %s270 = sand.u32 %s50, 1
          %s271 = smul.addr %s270, 8
          %s272 = scalar_lea.vmem [#allocation3], %s271
          %274 = vsyncadd %s269, 0
          %s275 = smul.addr %s35, 8
          %s276 = scalar_lea.hbm %s0, %s275
          %s278 = sshll.u32 %s276, 4
          %s279 = int_to_ptr.hbm [resolvable:$true] %s278
          %s280 = sshll.u32 %s272, 4
          %s281 = int_to_ptr.vmem [resolvable:$true] %s280
          %283 = dma.hbm_to_vmem [thread:$0]  %s279, 128, %s281, %s269
        $region24: #{tpu_custom_call.1} parent=19 // pred_fallthru
          _
        // Predicated region
        $region25: #{tpu_custom_call.1} parent=19 // pred_check
          %p284 = pneg %p86
        $region26: #{tpu_custom_call.1} parent=19 // pred_check_branch
          %286 = sbr.rel (%p284) target = $region28
        $region27: #{tpu_custom_call.1} parent=19 // pred_region
          %s287 = sand.u32 %s28, 1
          %s288 = scalar_lea.sflag [#allocation7], %s287
          %s289 = sand.u32 %s76, 1
          %s290 = smul.addr %s289, 256
          %s291 = scalar_lea.vmem [#allocation6], %s290
          %s292 = smul.u32 2, %s36
          %294 = vsyncadd %s288, 0
          %s295 = smul.addr %s292, 8
          %s296 = scalar_lea.hbm %s1, %s295
          %s297 = sshll.u32 %s296, 4
          %s298 = int_to_ptr.hbm [resolvable:$true] %s297
          %s299 = sshll.u32 %s291, 4
          %s300 = int_to_ptr.vmem [resolvable:$true] %s299
          %305 = dma.hbm_to_vmem [thread:$0]  %s298, 4096, %s300, %s288, 512, 256, 16
        $region28: #{tpu_custom_call.1} parent=19 // pred_fallthru
          _
        // Predicated region
        $region29: #{tpu_custom_call.1} parent=19 // pred_check
          %p306 = pneg %p112
        $region30: #{tpu_custom_call.1} parent=19 // pred_check_branch
          %308 = sbr.rel (%p306) target = $region32
        $region31: #{tpu_custom_call.1} parent=19 // pred_region
          %s309 = sand.u32 %s28, 1
          %s310 = scalar_lea.sflag [#allocation7], %s309
          %s311 = sand.u32 %s102, 1
          %s312 = smul.addr %s311, 256
          %s313 = scalar_lea.vmem [#allocation8], %s312
          %s314 = smul.u32 2, %s36
          %316 = vsyncadd %s310, 0
          %s317 = smul.addr %s314, 8
          %s318 = scalar_lea.hbm %s2, %s317
          %s319 = sshll.u32 %s318, 4
          %s320 = int_to_ptr.hbm [resolvable:$true] %s319
          %s321 = sshll.u32 %s313, 4
          %s322 = int_to_ptr.vmem [resolvable:$true] %s321
          %327 = dma.hbm_to_vmem [thread:$0]  %s320, 4096, %s322, %s310, 512, 256, 16
        $region32: #{tpu_custom_call.1} parent=19 // pred_fallthru
          _
        // Predicated region
        $region33: #{tpu_custom_call.1} parent=19 // pred_check
          %p328 = pneg %p138
        $region34: #{tpu_custom_call.1} parent=19 // pred_check_branch
          %330 = sbr.rel (%p328) target = $region36
        $region35: #{tpu_custom_call.1} parent=19 // pred_region
          %s331 = sand.u32 %s28, 1
          %s332 = scalar_lea.sflag [#allocation10], %s331
          %s333 = sand.u32 %s128, 1
          %s334 = smul.addr %s333, 2
          %s335 = scalar_lea.vmem [#allocation9], %s334
          %s336 = smul.u32 2, %s36
          %338 = vsyncadd %s332, 0
          %s339 = scalar_lea.hbm %s3, %s336
          %s341 = sshll.u32 %s339, 4
          %s342 = int_to_ptr.hbm [resolvable:$true] %s341
          %s343 = sshll.u32 %s335, 4
          %s344 = int_to_ptr.vmem [resolvable:$true] %s343
          %346 = dma.hbm_to_vmem [thread:$0]  %s342, 32, %s344, %s332
        $region36: #{tpu_custom_call.1} parent=19 // pred_fallthru
          _
        // Predicated region
        $region37: #{tpu_custom_call.1} parent=19 // pred_check
          %p347 = pneg %p164
        $region38: #{tpu_custom_call.1} parent=19 // pred_check_branch
          %349 = sbr.rel (%p347) target = $region40
        $region39: #{tpu_custom_call.1} parent=19 // pred_region
          %s350 = sand.u32 %s28, 1
          %s351 = scalar_lea.sflag [#allocation10], %s350
          %s352 = sand.u32 %s154, 1
          %s353 = smul.addr %s352, 2
          %s354 = scalar_lea.vmem [#allocation11], %s353
          %s355 = smul.u32 2, %s36
          %357 = vsyncadd %s351, 0
          %s358 = scalar_lea.hbm %s4, %s355
          %s360 = sshll.u32 %s358, 4
          %s361 = int_to_ptr.hbm [resolvable:$true] %s360
          %s362 = sshll.u32 %s354, 4
          %s363 = int_to_ptr.vmem [resolvable:$true] %s362
          %365 = dma.hbm_to_vmem [thread:$0]  %s361, 32, %s363, %s351
        $region40: #{tpu_custom_call.1} parent=19 // pred_fallthru
          _
        // Predicated region
        $region41: #{tpu_custom_call.1} parent=19 // pred_check
          %p366 = pneg %p190
        $region42: #{tpu_custom_call.1} parent=19 // pred_check_branch
          %368 = sbr.rel (%p366) target = $region44
        $region43: #{tpu_custom_call.1} parent=19 // pred_region
          %s369 = sand.u32 %s180, 1
          %s370 = scalar_lea.sflag [#allocation13], %s369
          %s371 = sand.u32 %s180, 1
          %s372 = smul.addr %s371, 256
          %s373 = scalar_lea.vmem [#allocation12], %s372
          %s374 = smul.u32 32, %s36
          %376 = vsyncadd %s370, 0
          %s377 = smul.addr %s374, 8
          %s378 = scalar_lea.hbm %s5, %s377
          %s379 = sshll.u32 %s378, 4
          %s380 = int_to_ptr.hbm [resolvable:$true] %s379
          %s381 = sshll.u32 %s373, 4
          %s382 = int_to_ptr.vmem [resolvable:$true] %s381
          %387 = dma.hbm_to_vmem [thread:$0]  %s380, 4096, %s382, %s370, 128, 128, 8
        $region44: #{tpu_custom_call.1} parent=19 // pred_fallthru
          _
      $region20: #{tpu_custom_call.1} parent=5 // pred_fallthru
        _
      %p388 = scmp.le.s32.totalorder 1, %s28
      %p389 = scmp.lt.s32.totalorder %s28, 7
      %p390 = pnand %p388, %p389
      %p391 = pneg %p390
      // Predicated region
      $region45: #{tpu_custom_call.1} parent=5 // pred_check
        _
      $region46: #{tpu_custom_call.1} parent=5 // pred_check_branch
        %393 = sbr.rel (%p390) target = $region48
      $region47: #{tpu_custom_call.1} parent=5 // pred_region
        %s394 = ssub.s32 %s28, 1
        %s395 = sand.u32 %s53, 1
        %s396 = scalar_lea.sflag [#allocation4], %s395
        %s397 = sand.u32 %s53, 1
        %s398 = smul.addr %s397, 8
        %s399 = scalar_lea.vmem [#allocation3], %s398
        // Predicated region
        $region49: #{tpu_custom_call.1} parent=47 // pred_check
          %p400 = pneg %p66
        $region50: #{tpu_custom_call.1} parent=47 // pred_check_branch
          %402 = sbr.rel (%p400) target = $region52
        $region51: #{tpu_custom_call.1} parent=47 // pred_region
          %404 = dma.done %s396, 128
        $region52: #{tpu_custom_call.1} parent=47 // pred_fallthru
          _
        %s405 = sand.u32 %s33, 1
        %s406 = scalar_lea.sflag [#allocation7], %s405
        %s407 = sand.u32 %s79, 1
        %s408 = smul.addr %s407, 256
        %s409 = scalar_lea.vmem [#allocation6], %s408
        // Predicated region
        $region53: #{tpu_custom_call.1} parent=47 // pred_check
          %p410 = pneg %p92
        $region54: #{tpu_custom_call.1} parent=47 // pred_check_branch
          %412 = sbr.rel (%p410) target = $region56
        $region55: #{tpu_custom_call.1} parent=47 // pred_region
          %414 = dma.done %s406, 4096
        $region56: #{tpu_custom_call.1} parent=47 // pred_fallthru
          _
        %s415 = sand.u32 %s33, 1
        %s416 = scalar_lea.sflag [#allocation7], %s415
        %s417 = sand.u32 %s105, 1
        %s418 = smul.addr %s417, 256
        %s419 = scalar_lea.vmem [#allocation8], %s418
        // Predicated region
        $region57: #{tpu_custom_call.1} parent=47 // pred_check
          %p420 = pneg %p118
        $region58: #{tpu_custom_call.1} parent=47 // pred_check_branch
          %422 = sbr.rel (%p420) target = $region60
        $region59: #{tpu_custom_call.1} parent=47 // pred_region
          %424 = dma.done %s416, 4096
        $region60: #{tpu_custom_call.1} parent=47 // pred_fallthru
          _
        %s425 = sand.u32 %s33, 1
        %s426 = scalar_lea.sflag [#allocation10], %s425
        %s427 = sand.u32 %s131, 1
        %s428 = smul.addr %s427, 2
        %s429 = scalar_lea.vmem [#allocation9], %s428
        // Predicated region
        $region61: #{tpu_custom_call.1} parent=47 // pred_check
          %p430 = pneg %p144
        $region62: #{tpu_custom_call.1} parent=47 // pred_check_branch
          %432 = sbr.rel (%p430) target = $region64
        $region63: #{tpu_custom_call.1} parent=47 // pred_region
          %434 = dma.done %s426, 32
        $region64: #{tpu_custom_call.1} parent=47 // pred_fallthru
          _
        %s435 = sand.u32 %s33, 1
        %s436 = scalar_lea.sflag [#allocation10], %s435
        %s437 = sand.u32 %s157, 1
        %s438 = smul.addr %s437, 2
        %s439 = scalar_lea.vmem [#allocation11], %s438
        // Predicated region
        $region65: #{tpu_custom_call.1} parent=47 // pred_check
          %p440 = pneg %p170
        $region66: #{tpu_custom_call.1} parent=47 // pred_check_branch
          %442 = sbr.rel (%p440) target = $region68
        $region67: #{tpu_custom_call.1} parent=47 // pred_region
          %444 = dma.done %s436, 32
        $region68: #{tpu_custom_call.1} parent=47 // pred_fallthru
          _
        %s445 = sand.u32 %s183, 1
        %s446 = scalar_lea.sflag [#allocation13], %s445
        %s447 = sand.u32 %s183, 1
        %s448 = smul.addr %s447, 256
        %s449 = scalar_lea.vmem [#allocation12], %s448
        // Predicated region
        $region69: #{tpu_custom_call.1} parent=47 // pred_check
          %p450 = pneg %p196
        $region70: #{tpu_custom_call.1} parent=47 // pred_check_branch
          %452 = sbr.rel (%p450) target = $region72
        $region71: #{tpu_custom_call.1} parent=47 // pred_region
          %454 = dma.done %s446, 4096
        $region72: #{tpu_custom_call.1} parent=47 // pred_fallthru
          _
        %s455 = sand.u32 %s53, 1
        %s456 = scalar_lea.sflag [#allocation4], %s455
        %s457 = sand.u32 %s53, 1
        %s458 = smul.addr %s457, 8
        %s459 = scalar_lea.vmem [#allocation3], %s458
        %p460 = pneg %p66
        %p461 = pneg %p63
        %s462 = sand.u32 %s33, 1
        %s463 = scalar_lea.sflag [#allocation7], %s462
        %s464 = sand.u32 %s79, 1
        %s465 = smul.addr %s464, 256
        %s466 = scalar_lea.vmem [#allocation6], %s465
        %p467 = pneg %p92
        %p468 = pneg %p89
        %s469 = sand.u32 %s33, 1
        %s470 = scalar_lea.sflag [#allocation7], %s469
        %s471 = sand.u32 %s105, 1
        %s472 = smul.addr %s471, 256
        %s473 = scalar_lea.vmem [#allocation8], %s472
        %p474 = pneg %p118
        %p475 = pneg %p115
        %s476 = sand.u32 %s33, 1
        %s477 = scalar_lea.sflag [#allocation10], %s476
        %s478 = sand.u32 %s131, 1
        %s479 = smul.addr %s478, 2
        %s480 = scalar_lea.vmem [#allocation9], %s479
        %p481 = pneg %p144
        %p482 = pneg %p141
        %s483 = sand.u32 %s33, 1
        %s484 = scalar_lea.sflag [#allocation10], %s483
        %s485 = sand.u32 %s157, 1
        %s486 = smul.addr %s485, 2
        %s487 = scalar_lea.vmem [#allocation11], %s486
        %p488 = pneg %p170
        %p489 = pneg %p167
        %s490 = sand.u32 %s183, 1
        %s491 = scalar_lea.sflag [#allocation13], %s490
        %s492 = sand.u32 %s183, 1
        %s493 = smul.addr %s492, 256
        %s494 = scalar_lea.vmem [#allocation12], %s493
        %p495 = pneg %p196
        %p496 = pneg %p193
        %p497 = pneg %p217
        %p498 = pneg %p214
        %p499 = pneg %p243
        %p500 = pneg %p240
        %s501 = sand.u32 %s230, 1
        %s502 = scalar_lea.sflag [#allocation5], %s501
        %s503 = sand.u32 %s230, 1
        %s504 = smul.addr %s503, 8
        %s505 = scalar_lea.vmem [#allocation14], %s504
        %s506 = smul.u32 2, %s38
        %s507 = smul.u32 2, %s38
        %s508 = smul.u32 2, %s38
        %s509 = smul.u32 2, %s38
        %s510 = smul.u32 32, %s38
        %p511 = scmp.eq.s32.totalorder %s38, 0
        // Predicated region
        $region73: #{tpu_custom_call.1} parent=47 // pred_check
          %p512 = pneg %p511
        $region74: #{tpu_custom_call.1} parent=47 // pred_check_branch
          %514 = sbr.rel (%p512) target = $region76
        $region75: #{tpu_custom_call.1} parent=47 // pred_region
          %515 = vst [vmem:[#allocation2] sm:$0xff] 0.0
        $region76: #{tpu_custom_call.1} parent=47 // pred_fallthru
          _
        %v516 = vld [vmem:[%s399] sm:$0xff]
        %v517 = vld [vmem:[%s409] sm:$0xff]
        %v518 = vld [vmem:[%s409 + $0x8] sm:$0xff]
        %v519 = vld [vmem:[%s409 + $0x10] sm:$0xff]
        %v520 = vld [vmem:[%s409 + $0x18] sm:$0xff]
        %v521 = vld [vmem:[%s409 + $0x20] sm:$0xff]
        %v522 = vld [vmem:[%s409 + $0x28] sm:$0xff]
        %v523 = vld [vmem:[%s409 + $0x30] sm:$0xff]
        %v524 = vld [vmem:[%s409 + $0x38] sm:$0xff]
        %v525 = vld [vmem:[%s409 + $0x40] sm:$0xff]
        %v526 = vld [vmem:[%s409 + $0x48] sm:$0xff]
        %v527 = vld [vmem:[%s409 + $0x50] sm:$0xff]
        %v528 = vld [vmem:[%s409 + $0x58] sm:$0xff]
        %v529 = vld [vmem:[%s409 + $0x60] sm:$0xff]
        %v530 = vld [vmem:[%s409 + $0x68] sm:$0xff]
        %v531 = vld [vmem:[%s409 + $0x70] sm:$0xff]
        %v532 = vld [vmem:[%s409 + $0x78] sm:$0xff]
        %v533 = vld [vmem:[%s409 + $0x80] sm:$0xff]
        %v534 = vld [vmem:[%s409 + $0x88] sm:$0xff]
        %v535 = vld [vmem:[%s409 + $0x90] sm:$0xff]
        %v536 = vld [vmem:[%s409 + $0x98] sm:$0xff]
        %v537 = vld [vmem:[%s409 + $0xa0] sm:$0xff]
        %v538 = vld [vmem:[%s409 + $0xa8] sm:$0xff]
        %v539 = vld [vmem:[%s409 + $0xb0] sm:$0xff]
        %v540 = vld [vmem:[%s409 + $0xb8] sm:$0xff]
        %v541 = vld [vmem:[%s409 + $0xc0] sm:$0xff]
        %v542 = vld [vmem:[%s409 + $0xc8] sm:$0xff]
        %v543 = vld [vmem:[%s409 + $0xd0] sm:$0xff]
        %v544 = vld [vmem:[%s409 + $0xd8] sm:$0xff]
        %v545 = vld [vmem:[%s409 + $0xe0] sm:$0xff]
        %v546 = vld [vmem:[%s409 + $0xe8] sm:$0xff]
        %v547 = vld [vmem:[%s409 + $0xf0] sm:$0xff]
        %v548 = vld [vmem:[%s409 + $0xf8] sm:$0xff]
        %v549 = vld [vmem:[%s429] sm:$0x3]
        %v551 = vperm.slane %v549, 0
        %v552 = vperm.slane %v549, 1
        %555 = vmatpush.msra.mxu0 %v547
        %556 = vmatpush.msra.mxu0 %v545
        %557 = vmatpush.msra.mxu0 %v543
        %558 = vmatpush.msra.mxu0 %v541
        %559 = vmatpush.msra.mxu0 %v539
        %560 = vmatpush.msra.mxu0 %v537
        %561 = vmatpush.msra.mxu0 %v535
        %562 = vmatpush.msra.mxu0 %v533
        %563 = vmatpush.msra.mxu0 %v531
        %564 = vmatpush.msra.mxu0 %v529
        %565 = vmatpush.msra.mxu0 %v527
        %566 = vmatpush.msra.mxu0 %v525
        %567 = vmatpush.msra.mxu0 %v523
        %568 = vmatpush.msra.mxu0 %v521
        %569 = vmatpush.msra.mxu0 %v519
        %570 = vmatpush.msra.mxu0 %v517
        %571 = vmatmul.f32.gmra.mxu0 %v516
        %v572 = vpop.f32.mrf.mxu0
        %v573 = vadd.f32 %v551, %v572
        %574 = vdwg.mxu0
        %575 = vmatpush.msra.mxu0 %v548
        %576 = vmatpush.msra.mxu0 %v546
        %577 = vmatpush.msra.mxu0 %v544
        %578 = vmatpush.msra.mxu0 %v542
        %579 = vmatpush.msra.mxu0 %v540
        %580 = vmatpush.msra.mxu0 %v538
        %581 = vmatpush.msra.mxu0 %v536
        %582 = vmatpush.msra.mxu0 %v534
        %583 = vmatpush.msra.mxu0 %v532
        %584 = vmatpush.msra.mxu0 %v530
        %585 = vmatpush.msra.mxu0 %v528
        %586 = vmatpush.msra.mxu0 %v526
        %587 = vmatpush.msra.mxu0 %v524
        %588 = vmatpush.msra.mxu0 %v522
        %589 = vmatpush.msra.mxu0 %v520
        %590 = vmatpush.msra.mxu0 %v518
        %591 = vmatmul.f32.gmra.mxu0 %v516
        %v592 = vpop.f32.mrf.mxu0
        %v593 = vadd.f32 %v552, %v592
        %594 = vdwg.mxu0
        %v595 = vld [vmem:[%s419] sm:$0xff]
        %v596 = vld [vmem:[%s419 + $0x8] sm:$0xff]
        %v597 = vld [vmem:[%s419 + $0x10] sm:$0xff]
        %v598 = vld [vmem:[%s419 + $0x18] sm:$0xff]
        %v599 = vld [vmem:[%s419 + $0x20] sm:$0xff]
        %v600 = vld [vmem:[%s419 + $0x28] sm:$0xff]
        %v601 = vld [vmem:[%s419 + $0x30] sm:$0xff]
        %v602 = vld [vmem:[%s419 + $0x38] sm:$0xff]
        %v603 = vld [vmem:[%s419 + $0x40] sm:$0xff]
        %v604 = vld [vmem:[%s419 + $0x48] sm:$0xff]
        %v605 = vld [vmem:[%s419 + $0x50] sm:$0xff]
        %v606 = vld [vmem:[%s419 + $0x58] sm:$0xff]
        %v607 = vld [vmem:[%s419 + $0x60] sm:$0xff]
        %v608 = vld [vmem:[%s419 + $0x68] sm:$0xff]
        %v609 = vld [vmem:[%s419 + $0x70] sm:$0xff]
        %v610 = vld [vmem:[%s419 + $0x78] sm:$0xff]
        %v611 = vld [vmem:[%s419 + $0x80] sm:$0xff]
        %v612 = vld [vmem:[%s419 + $0x88] sm:$0xff]
        %v613 = vld [vmem:[%s419 + $0x90] sm:$0xff]
        %v614 = vld [vmem:[%s419 + $0x98] sm:$0xff]
        %v615 = vld [vmem:[%s419 + $0xa0] sm:$0xff]
        %v616 = vld [vmem:[%s419 + $0xa8] sm:$0xff]
        %v617 = vld [vmem:[%s419 + $0xb0] sm:$0xff]
        %v618 = vld [vmem:[%s419 + $0xb8] sm:$0xff]
        %v619 = vld [vmem:[%s419 + $0xc0] sm:$0xff]
        %v620 = vld [vmem:[%s419 + $0xc8] sm:$0xff]
        %v621 = vld [vmem:[%s419 + $0xd0] sm:$0xff]
        %v622 = vld [vmem:[%s419 + $0xd8] sm:$0xff]
        %v623 = vld [vmem:[%s419 + $0xe0] sm:$0xff]
        %v624 = vld [vmem:[%s419 + $0xe8] sm:$0xff]
        %v625 = vld [vmem:[%s419 + $0xf0] sm:$0xff]
        %v626 = vld [vmem:[%s419 + $0xf8] sm:$0xff]
        %v627 = vld [vmem:[%s439] sm:$0x3]
        %v629 = vperm.slane %v627, 0
        %v630 = vperm.slane %v627, 1
        %633 = vmatpush.msra.mxu0 %v625
        %634 = vmatpush.msra.mxu0 %v623
        %635 = vmatpush.msra.mxu0 %v621
        %636 = vmatpush.msra.mxu0 %v619
        %637 = vmatpush.msra.mxu0 %v617
        %638 = vmatpush.msra.mxu0 %v615
        %639 = vmatpush.msra.mxu0 %v613
        %640 = vmatpush.msra.mxu0 %v611
        %641 = vmatpush.msra.mxu0 %v609
        %642 = vmatpush.msra.mxu0 %v607
        %643 = vmatpush.msra.mxu0 %v605
        %644 = vmatpush.msra.mxu0 %v603
        %645 = vmatpush.msra.mxu0 %v601
        %646 = vmatpush.msra.mxu0 %v599
        %647 = vmatpush.msra.mxu0 %v597
        %648 = vmatpush.msra.mxu0 %v595
        %649 = vmatmul.f32.gmra.mxu0 %v516
        %v650 = vpop.f32.mrf.mxu0
        %v651 = vadd.f32 %v629, %v650
        %652 = vdwg.mxu0
        %653 = vmatpush.msra.mxu0 %v626
        %654 = vmatpush.msra.mxu0 %v624
        %655 = vmatpush.msra.mxu0 %v622
        %656 = vmatpush.msra.mxu0 %v620
        %657 = vmatpush.msra.mxu0 %v618
        %658 = vmatpush.msra.mxu0 %v616
        %659 = vmatpush.msra.mxu0 %v614
        %660 = vmatpush.msra.mxu0 %v612
        %661 = vmatpush.msra.mxu0 %v610
        %662 = vmatpush.msra.mxu0 %v608
        %663 = vmatpush.msra.mxu0 %v606
        %664 = vmatpush.msra.mxu0 %v604
        %665 = vmatpush.msra.mxu0 %v602
        %666 = vmatpush.msra.mxu0 %v600
        %667 = vmatpush.msra.mxu0 %v598
        %668 = vmatpush.msra.mxu0 %v596
        %669 = vmatmul.f32.gmra.mxu0 %v516
        %v670 = vpop.f32.mrf.mxu0
        %v671 = vadd.f32 %v630, %v670
        %672 = vdwg.mxu0
        %v673 = vmul.f32 %v651, %v651
        %v674 = vmul.f32 %v671, %v671
        %v675 = vmul.f32 %v651, %v673
        %v676 = vmul.f32 %v671, %v674
        %v677 = vmul.f32 %v675, 0.044715
        %v678 = vmul.f32 %v676, 0.044715
        %v679 = vadd.f32 %v651, %v677
        %v680 = vadd.f32 %v671, %v678
        %v681 = vmul.f32 %v679, 0.7978846
        %v682 = vmul.f32 %v680, 0.7978846
        %v683 = vtanh.pop %v681
        %v684 = vtanh.pop %v682
        %v685 = vadd.f32 %v683, 1.0
        %v686 = vadd.f32 %v684, 1.0
        %v687 = vmul.f32 %v685, 0.5
        %v688 = vmul.f32 %v686, 0.5
        %v689 = vmul.f32 %v651, %v687
        %v690 = vmul.f32 %v671, %v688
        %v691 = vmul.f32 %v573, %v689
        %v692 = vmul.f32 %v593, %v690
        %v693 = vld [vmem:[#allocation2] sm:$0xff]
        %v694 = vld [vmem:[%s449] sm:$0xff]
        %v695 = vld [vmem:[%s449 + $0x8] sm:$0xff]
        %v696 = vld [vmem:[%s449 + $0x10] sm:$0xff]
        %v697 = vld [vmem:[%s449 + $0x18] sm:$0xff]
        %v698 = vld [vmem:[%s449 + $0x20] sm:$0xff]
        %v699 = vld [vmem:[%s449 + $0x28] sm:$0xff]
        %v700 = vld [vmem:[%s449 + $0x30] sm:$0xff]
        %v701 = vld [vmem:[%s449 + $0x38] sm:$0xff]
        %v702 = vld [vmem:[%s449 + $0x40] sm:$0xff]
        %v703 = vld [vmem:[%s449 + $0x48] sm:$0xff]
        %v704 = vld [vmem:[%s449 + $0x50] sm:$0xff]
        %v705 = vld [vmem:[%s449 + $0x58] sm:$0xff]
        %v706 = vld [vmem:[%s449 + $0x60] sm:$0xff]
        %v707 = vld [vmem:[%s449 + $0x68] sm:$0xff]
        %v708 = vld [vmem:[%s449 + $0x70] sm:$0xff]
        %v709 = vld [vmem:[%s449 + $0x78] sm:$0xff]
        %v710 = vld [vmem:[%s449 + $0x80] sm:$0xff]
        %v711 = vld [vmem:[%s449 + $0x88] sm:$0xff]
        %v712 = vld [vmem:[%s449 + $0x90] sm:$0xff]
        %v713 = vld [vmem:[%s449 + $0x98] sm:$0xff]
        %v714 = vld [vmem:[%s449 + $0xa0] sm:$0xff]
        %v715 = vld [vmem:[%s449 + $0xa8] sm:$0xff]
        %v716 = vld [vmem:[%s449 + $0xb0] sm:$0xff]
        %v717 = vld [vmem:[%s449 + $0xb8] sm:$0xff]
        %v718 = vld [vmem:[%s449 + $0xc0] sm:$0xff]
        %v719 = vld [vmem:[%s449 + $0xc8] sm:$0xff]
        %v720 = vld [vmem:[%s449 + $0xd0] sm:$0xff]
        %v721 = vld [vmem:[%s449 + $0xd8] sm:$0xff]
        %v722 = vld [vmem:[%s449 + $0xe0] sm:$0xff]
        %v723 = vld [vmem:[%s449 + $0xe8] sm:$0xff]
        %v724 = vld [vmem:[%s449 + $0xf0] sm:$0xff]
        %v725 = vld [vmem:[%s449 + $0xf8] sm:$0xff]
        %726 = vmatpush.msra.mxu0 %v709
        %727 = vmatpush.msra.mxu0 %v708
        %728 = vmatpush.msra.mxu0 %v707
        %729 = vmatpush.msra.mxu0 %v706
        %730 = vmatpush.msra.mxu0 %v705
        %731 = vmatpush.msra.mxu0 %v704
        %732 = vmatpush.msra.mxu0 %v703
        %733 = vmatpush.msra.mxu0 %v702
        %734 = vmatpush.msra.mxu0 %v701
        %735 = vmatpush.msra.mxu0 %v700
        %736 = vmatpush.msra.mxu0 %v699
        %737 = vmatpush.msra.mxu0 %v698
        %738 = vmatpush.msra.mxu0 %v697
        %739 = vmatpush.msra.mxu0 %v696
        %740 = vmatpush.msra.mxu0 %v695
        %741 = vmatpush.msra.mxu0 %v694
        %742 = vmatmul.f32.gmra.mxu0 %v691
        %v743 = vpop.f32.mrf.mxu0
        %v744 = vadd.f32 0.0, %v743
        %745 = vdwg.mxu0
        %746 = vmatpush.msra.mxu0 %v725
        %747 = vmatpush.msra.mxu0 %v724
        %748 = vmatpush.msra.mxu0 %v723
        %749 = vmatpush.msra.mxu0 %v722
        %750 = vmatpush.msra.mxu0 %v721
        %751 = vmatpush.msra.mxu0 %v720
        %752 = vmatpush.msra.mxu0 %v719
        %753 = vmatpush.msra.mxu0 %v718
        %754 = vmatpush.msra.mxu0 %v717
        %755 = vmatpush.msra.mxu0 %v716
        %756 = vmatpush.msra.mxu0 %v715
        %757 = vmatpush.msra.mxu0 %v714
        %758 = vmatpush.msra.mxu0 %v713
        %759 = vmatpush.msra.mxu0 %v712
        %760 = vmatpush.msra.mxu0 %v711
        %761 = vmatpush.msra.mxu0 %v710
        %762 = vmatmul.f32.gmra.mxu0 %v692
        %v763 = vpop.f32.mrf.mxu0
        %v764 = vadd.f32 %v744, %v763
        %765 = vdwg.mxu0
        %v766 = vadd.f32 %v693, %v764
        %767 = vst [vmem:[#allocation2] sm:$0xff] %v766
        %p768 = scmp.eq.s32.totalorder %s38, 1
        // Predicated region
        $region77: #{tpu_custom_call.1} parent=47 // pred_check
          %p769 = pneg %p768
        $region78: #{tpu_custom_call.1} parent=47 // pred_check_branch
          %771 = sbr.rel (%p769) target = $region80
        $region79: #{tpu_custom_call.1} parent=47 // pred_region
          %v772 = vld [vmem:[#allocation2] sm:$0xff]
          %v773 = vld [vmem:[%s6] sm:$0x1]
          %v775 = vperm.slane %v773, 0
          %v777 = vadd.f32 %v772, %v775
          %778 = vst [vmem:[%s505] sm:$0xff] %v777
        $region80: #{tpu_custom_call.1} parent=47 // pred_fallthru
          _
        %s779 = sand.u32 %s230, 1
        %s780 = scalar_lea.sflag [#allocation5], %s779
        %s781 = sand.u32 %s230, 1
        %s782 = smul.addr %s781, 8
        %s783 = scalar_lea.vmem [#allocation14], %s782
        // Predicated region
        $region81: #{tpu_custom_call.1} parent=47 // pred_check
          %p784 = pneg %p240
        $region82: #{tpu_custom_call.1} parent=47 // pred_check_branch
          %786 = sbr.rel (%p784) target = $region84
        $region83: #{tpu_custom_call.1} parent=47 // pred_region
          %788 = vsyncadd %s780, 0
          %s789 = smul.addr %s37, 8
          %s790 = scalar_lea.hbm %s7, %s789
          %s792 = sshll.u32 %s783, 4
          %s793 = int_to_ptr.vmem [resolvable:$true] %s792
          %s794 = sshll.u32 %s790, 4
          %s795 = int_to_ptr.hbm [resolvable:$true] %s794
          %797 = dma.vmem_to_hbm [thread:$0]  %s793, 128, %s795, %s780
        $region84: #{tpu_custom_call.1} parent=47 // pred_fallthru
          _
      $region48: #{tpu_custom_call.1} parent=5 // pred_fallthru
        _
      %p798 = scmp.le.s32.totalorder 2, %s28
      // Predicated region
      $region85: #{tpu_custom_call.1} parent=5 // pred_check
        %p799 = pneg %p798
      $region86: #{tpu_custom_call.1} parent=5 // pred_check_branch
        %801 = sbr.rel (%p799) target = $region88
      $region87: #{tpu_custom_call.1} parent=5 // pred_region
        %s802 = ssub.s32 %s28, 2
        // Predicated region
        $region89: #{tpu_custom_call.1} parent=87 // pred_check
          %p803 = pneg %p246
        $region90: #{tpu_custom_call.1} parent=87 // pred_check_branch
          %805 = sbr.rel (%p803) target = $region92
        $region91: #{tpu_custom_call.1} parent=87 // pred_region
          %s806 = sand.u32 %s231, 1
          %s807 = scalar_lea.sflag [#allocation5], %s806
          %s808 = sand.u32 %s231, 1
          %s809 = smul.addr %s808, 8
          %s810 = scalar_lea.vmem [#allocation14], %s809
          %812 = dma.done %s807, 128
        $region92: #{tpu_custom_call.1} parent=87 // pred_fallthru
          _
      $region88: #{tpu_custom_call.1} parent=5 // pred_fallthru
        _
    $region6: #{tpu_custom_call.1} parent=1 // loop_footer
      %s32 = sadd.s32 1, %s28
    $region7: #{tpu_custom_call.1} parent=1 // loop_footer_branch
      %27 = sbr.rel target = $region3
    $region8: #{tpu_custom_call.1} parent=1 // loop_exit
      _
    %813 = vsyncpa [#allocation4], 1
    %s814 = scalar_lea.sflag [#allocation4], 1
    %815 = vsyncpa %s814, 1
    %816 = vsyncpa [#allocation7], 1
    %s817 = scalar_lea.sflag [#allocation7], 1
    %818 = vsyncpa %s817, 1
    %819 = vsyncpa [#allocation10], 1
    %s820 = scalar_lea.sflag [#allocation10], 1
    %821 = vsyncpa %s820, 1
    %822 = vsyncpa [#allocation13], 1
    %s823 = scalar_lea.sflag [#allocation13], 1
    %824 = vsyncpa %s823, 1
    %825 = vsyncpa [#allocation5], 1
    %s826 = scalar_lea.sflag [#allocation5], 1
    %827 = vsyncpa %s826, 1

</llo_original>
